<compile_context>
chip_gen: v7x
topology: tpu7x:2x2x1
jax: 0.10.0
libtpu: 0.0.40
codegen_flags: <defaults>
</compile_context>

<pallas_src>
import jax
import jax.numpy as jnp
from jax import lax
from jax.experimental import pallas as pl
from jax.experimental.pallas import tpu as pltpu


def _round_up(x, m):
    return ((x + m - 1) // m) * m


def _make_mlm_kernel(tn):
    """Fused gather + Linear(D->H) + ReLU + LayerNorm + Linear(H->TV) tile kernel."""

    def kernel(pos_ref,                          # SMEM scalar prefetch: flat row ids (N_pad,)
               x_hbm,                            # (B*S, D) f32, left in HBM (pl.ANY)
               w1_ref, b1_ref, g_ref, beta_ref,  # small resident params
               w2_ref, b2_ref,                   # (H, TV) bf16 / (1, TV) f32 tiles
               o_ref,                            # (TN, TV) f32 output tile
               x_vmem, hn_vmem, sem):            # scratch
        i = pl.program_id(0)
        j = pl.program_id(1)

        # Everything that only depends on the N tile runs once (at j == 0) and
        # is reused for every V tile of this row block.
        @pl.when(j == 0)
        def _():
            base = i * tn

            # Fused gather: DMA the tn selected rows of X straight from HBM.
            @pl.loop(0, tn)
            def _issue(r):
                row = pos_ref[base + r]
                pltpu.make_async_copy(
                    x_hbm.at[pl.ds(row, 1), :],
                    x_vmem.at[pl.ds(r, 1), :],
                    sem).start()

            @pl.loop(0, tn)
            def _wait(r):
                pltpu.make_async_copy(
                    x_hbm.at[pl.ds(0, 1), :],
                    x_vmem.at[pl.ds(r, 1), :],
                    sem).wait()

            # Linear 1: bf16 on the MXU, f32 accumulate. Then ReLU.
            x = x_vmem[...].astype(jnp.bfloat16)
            h = jnp.dot(x, w1_ref[...], preferred_element_type=jnp.float32)
            h = jnp.maximum(h + b1_ref[...], 0.0)

            # LayerNorm over hidden dim (f32 math, eps matches torch 1e-5).
            mean = jnp.mean(h, axis=-1, keepdims=True)
            var = jnp.mean((h - mean) ** 2, axis=-1, keepdims=True)
            hn = (h - mean) * lax.rsqrt(var + 1e-5)
            hn = hn * g_ref[...] + beta_ref[...]
            hn_vmem[...] = hn.astype(jnp.bfloat16)

        # Linear 2 for this (TN, TV) tile: bf16 MXU, f32 accumulate + bias.
        o_ref[...] = (jnp.dot(hn_vmem[...], w2_ref[...],
                              preferred_element_type=jnp.float32)
                      + b2_ref[...]).astype(o_ref.dtype)

    return kernel


def mask_lm_forward(X, pred_positions, params):
    """Reproduces MaskLM.forward: gather X[b, pred_positions[b, p]] -> MLP -> (B, P, V)."""
    B, S, D = X.shape
    P = pred_positions.shape[1]
    w1, b1, gamma, beta, w2, b2 = params
    H = w1.shape[1]
    V = w2.shape[1]
    N = B * P

    # Tile sizes: N tiles in multiples of 8 (up to 128), V tiles lane-dense
    # multiples of 128 (up to 512 -- fits v7x's 64 MiB VMEM double-buffered).
    TN = min(128, _round_up(N, 8))
    N_pad = _round_up(N, TN)
    TV = min(512, _round_up(V, 128))
    V_pad = _round_up(V, TV)

    # Flat row indices into X viewed as (B*S, D); padded rows point at row 0.
    batch_idx = jnp.repeat(jnp.arange(B, dtype=jnp.int32), P)
    flat_pos = batch_idx * S + pred_positions.reshape(-1).astype(jnp.int32)
    flat_pos = jnp.pad(flat_pos, (0, N_pad - N))

    X_flat = X.reshape(B * S, D)

    # bf16 weights for the MXU / halved w2 HBM traffic; biases & LN stay f32.
    w1_b = w1.astype(jnp.bfloat16)
    w2_b = jnp.pad(w2, ((0, 0), (0, V_pad - V))).astype(jnp.bfloat16)
    b2_p = jnp.pad(b2, ((0, 0), (0, V_pad - V)))

    grid = (N_pad // TN, V_pad // TV)

    cost = pl.CostEstimate(
        flops=2 * N_pad * D * H + 2 * N_pad * H * V_pad,
        transcendentals=N_pad,
        bytes_accessed=(N_pad * D * 4          # gathered rows
                        + D * H * 2            # w1 (bf16)
                        + H * V_pad * 2        # w2 (bf16)
                        + V_pad * 4            # b2
                        + N_pad * V_pad * 4))  # logits writeback

    out = pl.pallas_call(
        _make_mlm_kernel(TN),
        out_shape=jax.ShapeDtypeStruct((N_pad, V_pad), jnp.float32),
        grid_spec=pltpu.PrefetchScalarGridSpec(
            num_scalar_prefetch=1,
            grid=grid,
            in_specs=[
                pl.BlockSpec(memory_space=pl.ANY),                 # X stays in HBM
                pl.BlockSpec((D, H), lambda i, j, pos: (0, 0)),    # w1 (resident)
                pl.BlockSpec((1, H), lambda i, j, pos: (0, 0)),    # b1
                pl.BlockSpec((1, H), lambda i, j, pos: (0, 0)),    # gamma
                pl.BlockSpec((1, H), lambda i, j, pos: (0, 0)),    # beta
                pl.BlockSpec((H, TV), lambda i, j, pos: (0, j)),   # w2 tile
                pl.BlockSpec((1, TV), lambda i, j, pos: (0, j)),   # b2 tile
            ],
            out_specs=pl.BlockSpec((TN, TV), lambda i, j, pos: (i, j)),
            scratch_shapes=[
                pltpu.VMEM((TN, D), jnp.float32),     # gathered input rows
                pltpu.VMEM((TN, H), jnp.bfloat16),    # hn, reused across V tiles
                pltpu.SemaphoreType.DMA(()),
            ]),
        compiler_params=pltpu.CompilerParams(
            dimension_semantics=("parallel", "arbitrary")),
        cost_estimate=cost,
    )(flat_pos, X_flat, w1_b, b1, gamma, beta, w2_b, b2_p)

    # TODO(synk): optionally emit bf16 logits / fuse log-softmax if the
    # downstream loss tolerates it (halves the dominant HBM write).
    return out[:N, :V].reshape(B, P, V)


def init_params(key, num_inputs, num_hiddens, vocab_size):
    k1, k2, k3, k4 = jax.random.split(key, 4)
    lim1 = 1.0 / jnp.sqrt(num_inputs)
    lim2 = 1.0 / jnp.sqrt(num_hiddens)
    w1 = jax.random.uniform(k1, (num_inputs, num_hiddens), jnp.float32, -lim1, lim1)
    b1 = jax.random.uniform(k2, (1, num_hiddens), jnp.float32, -lim1, lim1)
    gamma = jnp.ones((1, num_hiddens), jnp.float32)
    beta = jnp.zeros((1, num_hiddens), jnp.float32)
    w2 = jax.random.uniform(k3, (num_hiddens, vocab_size), jnp.float32, -lim2, lim2)
    b2 = jax.random.uniform(k4, (1, vocab_size), jnp.float32, -lim2, lim2)
    return (w1, b1, gamma, beta, w2, b2)


if __name__ == "__main__":
    # Small shapes consistent with MaskLM's forward.
    B, S = 2, 16
    num_inputs = 32
    num_hiddens = 32
    vocab_size = 128
    num_pred = 8

    key = jax.random.PRNGKey(0)
    kx, kp, kparam = jax.random.split(key, 3)

    X = jax.random.normal(kx, (B, S, num_inputs), jnp.float32)
    pred_positions = jax.random.randint(kp, (B, num_pred), 0, S, jnp.int32)
    params = init_params(kparam, num_inputs, num_hiddens, vocab_size)

    y = mask_lm_forward(X, pred_positions, params)
    jax.block_until_ready(y)

    # Reference check in plain JAX (f32); kernel uses bf16 MXU -> loose tol.
    batch_idx = jnp.repeat(jnp.arange(B), num_pred)
    masked = X[batch_idx, pred_positions.reshape(-1)]
    w1, b1, gamma, beta, w2, b2 = params
    h = jnp.maximum(masked @ w1 + b1, 0.0)
    mu = h.mean(-1, keepdims=True)
    var = ((h - mu) ** 2).mean(-1, keepdims=True)
    hn = (h - mu) / jnp.sqrt(var + 1e-5) * gamma + beta
    ref = (hn @ w2 + b2).reshape(B, num_pred, vocab_size)
    assert jnp.allclose(y, ref, atol=5e-2, rtol=5e-2), (
        "mismatch vs reference, max err=%g" % float(jnp.max(jnp.abs(y - ref))))

    print("KERNEL_OK")
</pallas_src>

<mosaic_0001>
module attributes {stable_mosaic.version = 11 : i64} {
  func.func @kernel(%arg0: i32, %arg1: i32, %arg2: memref<16xi32, #tpu.memory_space<smem>>, %arg3: memref<32x32xf32, #tpu.memory_space<any>>, %arg4: memref<32x32xbf16, #tpu.memory_space<vmem>>, %arg5: memref<1x32xf32, #tpu.memory_space<vmem>>, %arg6: memref<1x32xf32, #tpu.memory_space<vmem>>, %arg7: memref<1x32xf32, #tpu.memory_space<vmem>>, %arg8: memref<32x128xbf16, #tpu.memory_space<vmem>>, %arg9: memref<1x128xf32, #tpu.memory_space<vmem>>, %arg10: memref<16x128xf32, #tpu.memory_space<vmem>>, %arg11: memref<16x32xf32, #tpu.memory_space<vmem>>, %arg12: memref<16x32xbf16, #tpu.memory_space<vmem>>, %arg13: memref<!tpu.dma_semaphore, #tpu.memory_space<semaphore_mem>>) attributes {dimension_semantics = [#tpu.dimension_semantics<parallel>, #tpu.dimension_semantics<arbitrary>], iteration_bounds = array<i64: 1, 1>, scalar_prefetch = 1 : i64, scratch_operands = 3 : i64, tpu.core_type = #tpu.core_type<tc>, window_params = [{}, {pipeline_mode = #tpu.pipeline_mode<synchronous>, transform_indices = @transform_1, window_bounds = array<i64: 32, 32>}, {pipeline_mode = #tpu.pipeline_mode<synchronous>, transform_indices = @transform_2, window_bounds = array<i64: 1, 32>}, {pipeline_mode = #tpu.pipeline_mode<synchronous>, transform_indices = @transform_3, window_bounds = array<i64: 1, 32>}, {pipeline_mode = #tpu.pipeline_mode<synchronous>, transform_indices = @transform_4, window_bounds = array<i64: 1, 32>}, {transform_indices = @transform_5, window_bounds = array<i64: 32, 128>}, {transform_indices = @transform_6, window_bounds = array<i64: 1, 128>}, {transform_indices = @transform_7, window_bounds = array<i64: 16, 128>}]} {
    %c0_i32 = arith.constant 0 : i32
    %0 = arith.cmpi eq, %arg1, %c0_i32 : i32
    %1 = arith.extui %0 : i1 to i32
    %c0_i32_0 = arith.constant 0 : i32
    %2 = arith.cmpi ne, %1, %c0_i32_0 : i32
    scf.if %2 {
      %c16_i32 = arith.constant 16 : i32
      %10 = arith.muli %arg0, %c16_i32 : i32
      %c0_i32_8 = arith.constant 0 : i32
      %c16_i32_9 = arith.constant 16 : i32
      %11 = arith.addi %c0_i32_8, %c16_i32_9 : i32
      %c1_i32 = arith.constant 1 : i32
      scf.for %arg14 = %c0_i32_8 to %11 step %c1_i32  : i32 {
        %c1_i32_34 = arith.constant 1 : i32
        %48 = arith.muli %arg14, %c1_i32_34 : i32
        %c0_i32_35 = arith.constant 0 : i32
        %49 = arith.addi %c0_i32_35, %48 : i32
        %50 = arith.addi %10, %49 : i32
        %51 = arith.index_cast %50 : i32 to index
        %52 = memref.load %arg2[%51] : memref<16xi32, #tpu.memory_space<smem>>
        %c0_i32_36 = arith.constant 0 : i32
        %53 = tpu.memref_slice %arg3[%52, %c0_i32_36] : memref<32x32xf32, #tpu.memory_space<any>> -> memref<1x32xf32, #tpu.memory_space<any>>
        %c0_i32_37 = arith.constant 0 : i32
        %54 = tpu.memref_slice %arg11[%49, %c0_i32_37] : memref<16x32xf32, #tpu.memory_space<vmem>> -> memref<1x32xf32, #tpu.memory_space<vmem>>
        tpu.enqueue_dma source(%53 : memref<1x32xf32, #tpu.memory_space<any>>) target(%54 : memref<1x32xf32, #tpu.memory_space<vmem>>) target_semaphore(%arg13 : memref<!tpu.dma_semaphore, #tpu.memory_space<semaphore_mem>>)
      }
      %c16_i32_10 = arith.constant 16 : i32
      %c0_i32_11 = arith.constant 0 : i32
      %c16_i32_12 = arith.constant 16 : i32
      %12 = arith.addi %c0_i32_11, %c16_i32_12 : i32
      %c1_i32_13 = arith.constant 1 : i32
      scf.for %arg14 = %c0_i32_11 to %12 step %c1_i32_13  : i32 {
        %c1_i32_34 = arith.constant 1 : i32
        %48 = arith.muli %arg14, %c1_i32_34 : i32
        %c0_i32_35 = arith.constant 0 : i32
        %49 = arith.addi %c0_i32_35, %48 : i32
        %c0_i32_36 = arith.constant 0 : i32
        %c0_i32_37 = arith.constant 0 : i32
        %50 = tpu.memref_slice %arg3[%c0_i32_36, %c0_i32_37] : memref<32x32xf32, #tpu.memory_space<any>> -> memref<1x32xf32, #tpu.memory_space<any>>
        %c0_i32_38 = arith.constant 0 : i32
        %51 = tpu.memref_slice %arg11[%49, %c0_i32_38] : memref<16x32xf32, #tpu.memory_space<vmem>> -> memref<1x32xf32, #tpu.memory_space<vmem>>
        tpu.wait_dma2 semaphore(%arg13 : memref<!tpu.dma_semaphore, #tpu.memory_space<semaphore_mem>>) src(%50 : memref<1x32xf32, #tpu.memory_space<any>>) dst(%51 : memref<1x32xf32, #tpu.memory_space<vmem>>)
      }
      %c16_i32_14 = arith.constant 16 : i32
      %c0_15 = arith.constant 0 : index
      %c0_16 = arith.constant 0 : index
      %13 = vector.load %arg11[%c0_15, %c0_16] : memref<16x32xf32, #tpu.memory_space<vmem>>, vector<16x32xf32>
      %14 = arith.truncf %13 : vector<16x32xf32> to vector<16x32xbf16>
      %c0_17 = arith.constant 0 : index
      %c0_18 = arith.constant 0 : index
      %15 = vector.load %arg4[%c0_17, %c0_18] : memref<32x32xbf16, #tpu.memory_space<vmem>>, vector<32x32xbf16>
      %cst_19 = arith.constant dense<0.000000e+00> : vector<16x32xf32>
      %16 = tpu.matmul %14, %15, %cst_19 {dimension_numbers = #tpu.dot_dimension_numbers<[1], [0], [0], [1], [0, 0, 1, 1], [], []>} : vector<16x32xbf16>, vector<32x32xbf16>, vector<16x32xf32> -> vector<16x32xf32>
      %c0_20 = arith.constant 0 : index
      %c0_21 = arith.constant 0 : index
      %17 = vector.load %arg5[%c0_20, %c0_21] : memref<1x32xf32, #tpu.memory_space<vmem>>, vector<1x32xf32>
      %18 = vector.broadcast %17 : vector<1x32xf32> to vector<16x32xf32>
      %19 = arith.addf %16, %18 : vector<16x32xf32>
      %cst_22 = arith.constant 0.000000e+00 : f32
      %20 = vector.broadcast %cst_22 : f32 to vector<16x32xf32>
      %21 = arith.maximumf %19, %20 : vector<16x32xf32>
      %cst_23 = arith.constant dense<0.000000e+00> : vector<16xf32>
      %22 = vector.multi_reduction <add>, %21, %cst_23 [1] : vector<16x32xf32> to vector<16xf32>
      %23 = vector.shape_cast %22 : vector<16xf32> to vector<16x1xf32>
      %cst_24 = arith.constant 3.200000e+01 : f32
      %24 = vector.broadcast %cst_24 : f32 to vector<16x1xf32>
      %25 = arith.divf %23, %24 : vector<16x1xf32>
      %26 = vector.broadcast %25 : vector<16x1xf32> to vector<16x32xf32>
      %27 = arith.subf %21, %26 : vector<16x32xf32>
      %28 = arith.mulf %27, %27 : vector<16x32xf32>
      %cst_25 = arith.constant dense<0.000000e+00> : vector<16xf32>
      %29 = vector.multi_reduction <add>, %28, %cst_25 [1] : vector<16x32xf32> to vector<16xf32>
      %30 = vector.shape_cast %29 : vector<16xf32> to vector<16x1xf32>
      %cst_26 = arith.constant 3.200000e+01 : f32
      %31 = vector.broadcast %cst_26 : f32 to vector<16x1xf32>
      %32 = arith.divf %30, %31 : vector<16x1xf32>
      %33 = vector.broadcast %25 : vector<16x1xf32> to vector<16x32xf32>
      %34 = arith.subf %21, %33 : vector<16x32xf32>
      %cst_27 = arith.constant 9.99999974E-6 : f32
      %35 = vector.broadcast %cst_27 : f32 to vector<16x1xf32>
      %36 = arith.addf %32, %35 : vector<16x1xf32>
      %37 = math.rsqrt %36 : vector<16x1xf32>
      %38 = vector.broadcast %37 : vector<16x1xf32> to vector<16x32xf32>
      %39 = arith.mulf %34, %38 : vector<16x32xf32>
      %c0_28 = arith.constant 0 : index
      %c0_29 = arith.constant 0 : index
      %40 = vector.load %arg6[%c0_28, %c0_29] : memref<1x32xf32, #tpu.memory_space<vmem>>, vector<1x32xf32>
      %41 = vector.broadcast %40 : vector<1x32xf32> to vector<16x32xf32>
      %42 = arith.mulf %39, %41 : vector<16x32xf32>
      %c0_30 = arith.constant 0 : index
      %c0_31 = arith.constant 0 : index
      %43 = vector.load %arg7[%c0_30, %c0_31] : memref<1x32xf32, #tpu.memory_space<vmem>>, vector<1x32xf32>
      %44 = vector.broadcast %43 : vector<1x32xf32> to vector<16x32xf32>
      %45 = arith.addf %42, %44 : vector<16x32xf32>
      %46 = arith.truncf %45 : vector<16x32xf32> to vector<16x32xbf16>
      %c0_32 = arith.constant 0 : index
      %c0_33 = arith.constant 0 : index
      %47 = vector.load %arg12[%c0_32, %c0_33] : memref<16x32xbf16, #tpu.memory_space<vmem>>, vector<16x32xbf16>
      tpu.vector_store %arg12[%c0_32, %c0_33], %46 {strides = array<i32>} : memref<16x32xbf16, #tpu.memory_space<vmem>>, vector<16x32xbf16>,
    } else {
    }
    %c0 = arith.constant 0 : index
    %c0_1 = arith.constant 0 : index
    %3 = vector.load %arg12[%c0, %c0_1] : memref<16x32xbf16, #tpu.memory_space<vmem>>, vector<16x32xbf16>
    %c0_2 = arith.constant 0 : index
    %c0_3 = arith.constant 0 : index
    %4 = vector.load %arg8[%c0_2, %c0_3] : memref<32x128xbf16, #tpu.memory_space<vmem>>, vector<32x128xbf16>
    %cst = arith.constant dense<0.000000e+00> : vector<16x128xf32>
    %5 = tpu.matmul %3, %4, %cst {dimension_numbers = #tpu.dot_dimension_numbers<[1], [0], [0], [1], [0, 0, 1, 1], [], []>} : vector<16x32xbf16>, vector<32x128xbf16>, vector<16x128xf32> -> vector<16x128xf32>
    %c0_4 = arith.constant 0 : index
    %c0_5 = arith.constant 0 : index
    %6 = vector.load %arg9[%c0_4, %c0_5] : memref<1x128xf32, #tpu.memory_space<vmem>>, vector<1x128xf32>
    %7 = vector.broadcast %6 : vector<1x128xf32> to vector<16x128xf32>
    %8 = arith.addf %5, %7 : vector<16x128xf32>
    %c0_6 = arith.constant 0 : index
    %c0_7 = arith.constant 0 : index
    %9 = vector.load %arg10[%c0_6, %c0_7] : memref<16x128xf32, #tpu.memory_space<vmem>>, vector<16x128xf32>
    tpu.vector_store %arg10[%c0_6, %c0_7], %8 {strides = array<i32>} : memref<16x128xf32, #tpu.memory_space<vmem>>, vector<16x128xf32>,
    return
  }
  func.func @transform_1(%arg0: i32, %arg1: i32, %arg2: memref<16xi32, #tpu.memory_space<smem>>) -> (i32, i32) {
    %c0_i32 = arith.constant 0 : i32
    %c0_i32_0 = arith.constant 0 : i32
    %c0_i32_1 = arith.constant 0 : i32
    return %c0_i32, %c0_i32_0 : i32, i32
  }
  func.func @transform_2(%arg0: i32, %arg1: i32, %arg2: memref<16xi32, #tpu.memory_space<smem>>) -> (i32, i32) {
    %c0_i32 = arith.constant 0 : i32
    %c0_i32_0 = arith.constant 0 : i32
    %c0_i32_1 = arith.constant 0 : i32
    return %c0_i32, %c0_i32_0 : i32, i32
  }
  func.func @transform_3(%arg0: i32, %arg1: i32, %arg2: memref<16xi32, #tpu.memory_space<smem>>) -> (i32, i32) {
    %c0_i32 = arith.constant 0 : i32
    %c0_i32_0 = arith.constant 0 : i32
    %c0_i32_1 = arith.constant 0 : i32
    return %c0_i32, %c0_i32_0 : i32, i32
  }
  func.func @transform_4(%arg0: i32, %arg1: i32, %arg2: memref<16xi32, #tpu.memory_space<smem>>) -> (i32, i32) {
    %c0_i32 = arith.constant 0 : i32
    %c0_i32_0 = arith.constant 0 : i32
    %c0_i32_1 = arith.constant 0 : i32
    return %c0_i32, %c0_i32_0 : i32, i32
  }
  func.func @transform_5(%arg0: i32, %arg1: i32, %arg2: memref<16xi32, #tpu.memory_space<smem>>) -> (i32, i32) {
    %c0_i32 = arith.constant 0 : i32
    %c0_i32_0 = arith.constant 0 : i32
    return %c0_i32, %arg1 : i32, i32
  }
  func.func @transform_6(%arg0: i32, %arg1: i32, %arg2: memref<16xi32, #tpu.memory_space<smem>>) -> (i32, i32) {
    %c0_i32 = arith.constant 0 : i32
    %c0_i32_0 = arith.constant 0 : i32
    return %c0_i32, %arg1 : i32, i32
  }
  func.func @transform_7(%arg0: i32, %arg1: i32, %arg2: memref<16xi32, #tpu.memory_space<smem>>) -> (i32, i32) {
    %c0_i32 = arith.constant 0 : i32
    return %arg0, %arg1 : i32, i32
  }
}

</mosaic_0001>

<llo_original>
// kernel: tpu_custom_call.1
$region0: #{tpu_custom_call.1}
  #allocation0 [shape = 'u32[]', space=smem, size = 0x4, offset = 0x4, fixed_abs, tag = 'smem constant byte address 0x4 - core index']
  #allocation1 [shape = 'u32[144,128]{1,0:T(1,128)}', space=vmem, size = 0x12000, scoped, tag = 'internal scratch']
  #allocation2 [shape = 'f32[16,32]{1,0:T(8,128)}', space=vmem, size = 0x2000, scoped, tag = 'scratch operand']
  #allocation3 [shape = 'bf16[16,32]{1,0:T(16,128)(2,1)}', space=vmem, size = 0x1000, scoped, tag = 'scratch operand']
  #allocation4 [shape = 's32[1]{0}', space=sflag, size = 0x4, scoped, tag = 'scratch operand']
  #allocation5 [shape = 's32[1]{0}', space=sflag, size = 0x4, scoped, tag = 'scoped memory for tpu_custom_call.1']
  #allocation6 [shape = 'u8[512]{0}', space=smem, size = 0x200, scoped, tag = 'prefetched SMEM operand 0']
  #allocation11 [shape = 's32[]', space=sflag, size = 0x4, offset = 0, fixed_abs, tag = 'sflag constant byte address 0x0 - dummy sync flag']
  #allocation12 [shape = 's32[]', space=sflag, size = 0x4, offset = 0, fixed_abs, tag = 'sflag constant byte address 0x0 - dummy sync flag']
  #allocation13 [shape = 'u32[]', space=smem, size = 0x4, offset = 0x44, fixed_abs, tag = 'smem constant byte address 0x44 - assertion arg 0']
  #allocation14 [shape = 'u32[]', space=smem, size = 0x4, offset = 0x48, fixed_abs, tag = 'smem constant byte address 0x48 - assertion arg 1']
  %s0 = inlined_call_operand.hbm [shape: s32[16], index: 0, kind: input, shape index: {}]
  %s1 = inlined_call_operand.hbm [shape: f32[32,32], index: 1, kind: input, shape index: {}]
  %s2 = inlined_call_operand.hbm [shape: bf16[32,32], index: 2, kind: input, shape index: {}]
  %s3 = inlined_call_operand.vmem [shape: f32[1,32], index: 3, kind: input, shape index: {}]
  %s4 = inlined_call_operand.vmem [shape: f32[1,32], index: 4, kind: input, shape index: {}]
  %s5 = inlined_call_operand.vmem [shape: f32[1,32], index: 5, kind: input, shape index: {}]
  %s6 = inlined_call_operand.vmem [shape: bf16[32,128], index: 6, kind: input, shape index: {}]
  %s7 = inlined_call_operand.vmem [shape: f32[1,128], index: 7, kind: input, shape index: {}]
  %s8 = inlined_call_operand.hbm [shape: f32[16,128], index: 8, kind: output, shape index: {}]
  %s9 = sld [smem:[#allocation0]]
  $region60: #{tpu_custom_call.1} parent=0
    _
  %s11 = ssub.s32 1, %s9
  %s12 = scalar_select 0, %s11, %s9
  %14 = dma.hbm_to_smem %s0, 16, [#allocation6], [#allocation5]
  %15 = dma.done [#allocation5], 16
  %16 = sfence
  $region1: #{tpu_custom_call.1} parent=0
    #allocation7 [shape = 'u8[8192]{0}', space=vmem, size = 0x2000, scoped, tag = 'input window, operand 2, single buffered']
    #allocation8 [shape = 's32[1]{0}', space=sflag, size = 0x4, scoped, tag = 'scoped memory for tpu_custom_call.1']
    #allocation9 [shape = 's32[1]{0}', space=sflag, size = 0x4, scoped, tag = 'scoped memory for tpu_custom_call.1']
    #allocation10 [shape = 'u8[8192]{0}', space=vmem, size = 0x2000, scoped, tag = 'output window, operand 0, single buffered']
    %17 = vsyncpa [#allocation8], 0
    %18 = vsyncpa [#allocation9], 0
    // Predicated region
    $region2: #{tpu_custom_call.1} parent=1 // pred_check
      _
    $region3: #{tpu_custom_call.1} parent=1 // pred_check_branch
      %20 = sbr.rel (0) target = $region5
    $region4: #{tpu_custom_call.1} parent=1 // pred_region
      %s22 = ssub.s32 256, 256
      %23 = vsyncadd [#allocation8], %s22
      %s24 = sshll.u32 [#allocation7], 4
      %s25 = int_to_ptr.vmem [resolvable:$true] %s24
      %30 = dma.hbm_to_vmem [thread:$0]  %s2, 256, %s25, [#allocation8], 64, 64, 4
    $region5: #{tpu_custom_call.1} parent=1 // pred_fallthru
      _
    // Predicated region
    $region6: #{tpu_custom_call.1} parent=1 // pred_check
      _
    $region7: #{tpu_custom_call.1} parent=1 // pred_check_branch
      %32 = sbr.rel (0) target = $region9
    $region8: #{tpu_custom_call.1} parent=1 // pred_region
      _
    $region9: #{tpu_custom_call.1} parent=1 // pred_fallthru
      _
    // Predicated region
    $region10: #{tpu_custom_call.1} parent=1 // pred_check
      _
    $region11: #{tpu_custom_call.1} parent=1 // pred_check_branch
      %34 = sbr.rel (0) target = $region13
    $region12: #{tpu_custom_call.1} parent=1 // pred_region
      _
    $region13: #{tpu_custom_call.1} parent=1 // pred_fallthru
      _
    // Predicated region
    $region14: #{tpu_custom_call.1} parent=1 // pred_check
      _
    $region15: #{tpu_custom_call.1} parent=1 // pred_check_branch
      %36 = sbr.rel (0) target = $region17
    $region16: #{tpu_custom_call.1} parent=1 // pred_region
      _
    $region17: #{tpu_custom_call.1} parent=1 // pred_fallthru
      _
    // Predicated region
    $region18: #{tpu_custom_call.1} parent=1 // pred_check
      _
    $region19: #{tpu_custom_call.1} parent=1 // pred_check_branch
      %38 = sbr.rel (0) target = $region21
    $region20: #{tpu_custom_call.1} parent=1 // pred_region
      _
    $region21: #{tpu_custom_call.1} parent=1 // pred_fallthru
      _
    // Predicated region
    $region22: #{tpu_custom_call.1} parent=1 // pred_check
      _
    $region23: #{tpu_custom_call.1} parent=1 // pred_check_branch
      %40 = sbr.rel (0) target = $region25
    $region24: #{tpu_custom_call.1} parent=1 // pred_region
      _
    $region25: #{tpu_custom_call.1} parent=1 // pred_fallthru
      _
    // Predicated region
    $region26: #{tpu_custom_call.1} parent=1 // pred_check
      _
    $region27: #{tpu_custom_call.1} parent=1 // pred_check_branch
      %42 = sbr.rel (0) target = $region29
    $region28: #{tpu_custom_call.1} parent=1 // pred_region
      %43 = dma.done [#allocation8], 256
    $region29: #{tpu_custom_call.1} parent=1 // pred_fallthru
      _
    %p45 = scmp.eq.s32.totalorder 0, 0
    // Predicated region
    $region30: #{tpu_custom_call.1} parent=1 // pred_check
      %p46 = pneg %p45
    $region31: #{tpu_custom_call.1} parent=1 // pred_check_branch
      %48 = sbr.rel (%p46) target = $region33
    $region32: #{tpu_custom_call.1} parent=1 // pred_region
      %s49 = smul.u32 0, 16
      loop: start=0, step=1, limit=16
      $region34: #{tpu_custom_call.1} parent=32 // loop_pre_header
        _
      $region35: #{tpu_custom_call.1} parent=32 // loop_header
        %s51 = sphi 0, %s55
        %p52 = scmp.ge.s32.totalorder %s51, 16
      $region36: #{tpu_custom_call.1} parent=32 // loop_header_branch
        %54 = sbr.rel (%p52) target = $region40
      $region37: #{tpu_custom_call.1} parent=32 // loop_body
        %s56 = sadd.s32 %s49, %s51
        %s57 = sld [smem:[#allocation6 + %s56]]
        %s58 = smul.addr %s57, 16
        %s59 = scalar_lea.hbm %s1, %s58
        %s60 = scalar_lea.vmem [#allocation2], %s51
        // Predicated region
        $region41: #{tpu_custom_call.1} parent=37 // pred_check
          _
        $region42: #{tpu_custom_call.1} parent=37 // pred_check_branch
          %62 = sbr.rel target = $region44
        $region43: #{tpu_custom_call.1} parent=37 // pred_region
          %63 = sst [smem:[#allocation13]] [#allocation12]
          %64 = sst [smem:[#allocation14]] [#allocation11]
        $region44: #{tpu_custom_call.1} parent=37 // pred_fallthru
          _
        %66 = shalt.err (0)
        %s68 = sshll.u32 %s60, 4
        %s69 = int_to_ptr.vmem [resolvable:$true] %s68
        %71 = dma.hbm_to_vmem [thread:$0]  %s59, 16, %s69, [#allocation4]
      $region38: #{tpu_custom_call.1} parent=32 // loop_footer
        %s55 = sadd.s32 1, %s51
      $region39: #{tpu_custom_call.1} parent=32 // loop_footer_branch
        %50 = sbr.rel target = $region35
      $region40: #{tpu_custom_call.1} parent=32 // loop_exit
        _
      loop: start=0, step=1, limit=16
      $region45: #{tpu_custom_call.1} parent=32 // loop_pre_header
        _
      $region46: #{tpu_custom_call.1} parent=32 // loop_header
        %s73 = sphi 0, %s77
        %p74 = scmp.ge.s32.totalorder %s73, 16
      $region47: #{tpu_custom_call.1} parent=32 // loop_header_branch
        %76 = sbr.rel (%p74) target = $region51
      $region48: #{tpu_custom_call.1} parent=32 // loop_body
        %s78 = smul.u32 1, 1
        %s79 = sshll.u32 %s78, 4
        %80 = dma.done [#allocation4], %s79
      $region49: #{tpu_custom_call.1} parent=32 // loop_footer
        %s77 = sadd.s32 1, %s73
      $region50: #{tpu_custom_call.1} parent=32 // loop_footer_branch
        %72 = sbr.rel target = $region46
      $region51: #{tpu_custom_call.1} parent=32 // loop_exit
        _
      %v81 = vld [vmem:[#allocation2] sm:$0xff]
      %v82 = vld [vmem:[#allocation2 + $0x8] sm:$0xff]
      %v83 = vpack.c.bf16 %v82, %v81
      %v84 = vld [vmem:[#allocation7] sm:$0xf]
      %v85 = vld [vmem:[#allocation7 + $0x4] sm:$0xf]
      %v86 = vld [vmem:[#allocation7 + $0x8] sm:$0xf]
      %v87 = vld [vmem:[#allocation7 + $0xc] sm:$0xf]
      %v88 = vld [vmem:[%s3] sm:$0x1]
      %v90 = vlaneseq
      %v91 = vshrl.u32 %v90, 7
      %v92 = vsub.s32 0, %v91
      %v93 = vrot.slane %v88, %v92
      %v99 = vunpack.c.l.b16 %v84
      %v100 = vunpack.c.l.b16 %v85
      %v101 = vunpack.c.l.b16 %v86
      %v102 = vunpack.c.l.b16 %v87
      %v103 = vpack.c.b16 %v100, %v99
      %v104 = vpack.c.b16 %v102, %v101
      %vm107 = vcmask 261120
      %v109 = vsel %vm107, %v83, 0
      %111 = vmatprep.subr.bf16.mxu0 0
      %112 = vmatpush1.bf16.msra.mxu0 %v103
      %113 = vmatprep.subr.bf16.mxu0 0
      %114 = vmatpush1.bf16.msra.mxu0 %v104
      %115 = vmatprep.subr.bf16.mxu0 0
      %116 = vmatpush1.bf16.msra.mxu0 0
      %117 = vmatprep.subr.bf16.mxu0 0
      %118 = vmatpush1.bf16.msra.mxu0 0
      %119 = vmatprep.subr.bf16.mxu0 0
      %120 = vmatpush1.bf16.msra.mxu0 0
      %121 = vmatprep.subr.bf16.mxu0 0
      %122 = vmatpush1.bf16.msra.mxu0 0
      %123 = vmatprep.subr.bf16.mxu0 0
      %124 = vmatpush1.bf16.msra.mxu0 0
      %125 = vmatprep.subr.bf16.mxu0 0
      %126 = vmatpush1.bf16.msra.mxu0 0
      %127 = vmatprep.subr.bf16.mxu0 0
      %128 = vmatpush1.bf16.msra.mxu0 0
      %129 = vmatprep.subr.bf16.mxu0 0
      %130 = vmatpush1.bf16.msra.mxu0 0
      %131 = vmatprep.subr.bf16.mxu0 0
      %132 = vmatpush1.bf16.msra.mxu0 0
      %133 = vmatprep.subr.bf16.mxu0 0
      %134 = vmatpush1.bf16.msra.mxu0 0
      %135 = vmatprep.subr.bf16.mxu0 0
      %136 = vmatpush1.bf16.msra.mxu0 0
      %137 = vmatprep.subr.bf16.mxu0 0
      %138 = vmatpush1.bf16.msra.mxu0 0
      %139 = vmatprep.subr.bf16.mxu0 0
      %140 = vmatpush1.bf16.msra.mxu0 0
      %141 = vmatprep.subr.bf16.mxu0 0
      %142 = vmatpush1.bf16.msra.mxu0 0
      %143 = vmatprep.mubr.bf16.mxu0 0
      %144 = vmatmul.mubr.bf16.gmra.mrb[0].mxu0 %v109
      %v145 = vpop.f32.mrb[0].mxu0
      %v146 = vadd.f32 %v93, %v145
      %v147 = vpop.f32.mrb[0].mxu0
      %v148 = vpop.f32.mrb[0].mxu0
      %v149 = vadd.f32 %v93, %v148
      %v150 = vpop.f32.mrb[0].mxu0
      %151 = vdwg.mxu0
      %v152 = vmax.f32 %v146, 0.0
      %v153 = vmax.f32 %v149, 0.0
      %v154 = vsel %vm107, %v152, 0.0
      %155 = vadd.xlane.f32.xlu0 %v154
      %v156 = vpop.xlane.xlu0 %155
      %v157 = vsel %vm107, %v153, 0.0
      %158 = vadd.xlane.f32.xlu0 %v157
      %v159 = vpop.xlane.xlu0 %158
      %v160 = vrcp.pop 32.0
      %v161 = vmul.f32 %v156, %v160
      %v162 = vmul.f32 %v159, %v160
      %v163 = vsub.f32 %v152, %v161
      %v164 = vsub.f32 %v153, %v162
      %v165 = vmul.f32 %v163, %v163
      %v166 = vmul.f32 %v164, %v164
      %v167 = vsel %vm107, %v165, 0.0
      %168 = vadd.xlane.f32.xlu0 %v167
      %v169 = vpop.xlane.xlu0 %168
      %v170 = vsel %vm107, %v166, 0.0
      %171 = vadd.xlane.f32.xlu0 %v170
      %v172 = vpop.xlane.xlu0 %171
      %v173 = vmul.f32 %v169, %v160
      %v174 = vmul.f32 %v172, %v160
      %v175 = vadd.f32 %v173, 1e-05
      %v176 = vadd.f32 %v174, 1e-05
      %v177 = vrsqrt.pop %v175
      %v178 = vrsqrt.pop %v176
      %v179 = vmul.f32 %v163, %v177
      %v180 = vmul.f32 %v164, %v178
      %v181 = vld [vmem:[%s4] sm:$0x1]
      %v183 = vlaneseq
      %v184 = vshrl.u32 %v183, 7
      %v185 = vsub.s32 0, %v184
      %v186 = vrot.slane %v181, %v185
      %v188 = vmul.f32 %v179, %v186
      %v189 = vmul.f32 %v180, %v186
      %v190 = vld [vmem:[%s5] sm:$0x1]
      %v192 = vlaneseq
      %v193 = vshrl.u32 %v192, 7
      %v194 = vsub.s32 0, %v193
      %v195 = vrot.slane %v190, %v194
      %v197 = vadd.f32 %v188, %v195
      %v198 = vadd.f32 %v189, %v195
      %v199 = vpack.c.bf16 %v198, %v197
      %200 = vst.msk [vmem:[#allocation3] sm:$0xff] %vm107, %v199
    $region33: #{tpu_custom_call.1} parent=1 // pred_fallthru
      _
    %v201 = vld [vmem:[#allocation3] sm:$0xff]
    %v202 = vld [vmem:[%s6] sm:$0xf]
    %v203 = vld [vmem:[%s6 + $0x4] sm:$0xf]
    %v204 = vld [vmem:[%s6 + $0x8] sm:$0xf]
    %v205 = vld [vmem:[%s6 + $0xc] sm:$0xf]
    %v206 = vld [vmem:[%s7] sm:$0x1]
    %v208 = vlaneseq
    %v209 = vshrl.u32 %v208, 7
    %v210 = vsub.s32 0, %v209
    %v211 = vrot.slane %v206, %v210
    %v217 = vunpack.c.l.b16 %v202
    %v218 = vunpack.c.l.b16 %v203
    %v219 = vunpack.c.l.b16 %v204
    %v220 = vunpack.c.l.b16 %v205
    %v221 = vpack.c.b16 %v218, %v217
    %v222 = vpack.c.b16 %v220, %v219
    %vm225 = vcmask 261120
    %v227 = vsel %vm225, %v201, 0
    %229 = vmatprep.subr.bf16.mxu0 0
    %230 = vmatpush1.bf16.msra.mxu0 %v221
    %231 = vmatprep.subr.bf16.mxu0 0
    %232 = vmatpush1.bf16.msra.mxu0 %v222
    %233 = vmatprep.subr.bf16.mxu0 0
    %234 = vmatpush1.bf16.msra.mxu0 0
    %235 = vmatprep.subr.bf16.mxu0 0
    %236 = vmatpush1.bf16.msra.mxu0 0
    %237 = vmatprep.subr.bf16.mxu0 0
    %238 = vmatpush1.bf16.msra.mxu0 0
    %239 = vmatprep.subr.bf16.mxu0 0
    %240 = vmatpush1.bf16.msra.mxu0 0
    %241 = vmatprep.subr.bf16.mxu0 0
    %242 = vmatpush1.bf16.msra.mxu0 0
    %243 = vmatprep.subr.bf16.mxu0 0
    %244 = vmatpush1.bf16.msra.mxu0 0
    %245 = vmatprep.subr.bf16.mxu0 0
    %246 = vmatpush1.bf16.msra.mxu0 0
    %247 = vmatprep.subr.bf16.mxu0 0
    %248 = vmatpush1.bf16.msra.mxu0 0
    %249 = vmatprep.subr.bf16.mxu0 0
    %250 = vmatpush1.bf16.msra.mxu0 0
    %251 = vmatprep.subr.bf16.mxu0 0
    %252 = vmatpush1.bf16.msra.mxu0 0
    %253 = vmatprep.subr.bf16.mxu0 0
    %254 = vmatpush1.bf16.msra.mxu0 0
    %255 = vmatprep.subr.bf16.mxu0 0
    %256 = vmatpush1.bf16.msra.mxu0 0
    %257 = vmatprep.subr.bf16.mxu0 0
    %258 = vmatpush1.bf16.msra.mxu0 0
    %259 = vmatprep.subr.bf16.mxu0 0
    %260 = vmatpush1.bf16.msra.mxu0 0
    %261 = vmatprep.mubr.bf16.mxu0 0
    %262 = vmatmul.mubr.bf16.gmra.mrb[0].mxu0 %v227
    %v263 = vpop.f32.mrb[0].mxu0
    %v264 = vadd.f32 %v211, %v263
    %v265 = vpop.f32.mrb[0].mxu0
    %v266 = vpop.f32.mrb[0].mxu0
    %v267 = vadd.f32 %v211, %v266
    %v268 = vpop.f32.mrb[0].mxu0
    %269 = vdwg.mxu0
    %270 = vst [vmem:[#allocation10] sm:$0xff] %v264
    %271 = vst [vmem:[#allocation10 + $0x8] sm:$0xff] %v267
    // Predicated region
    $region52: #{tpu_custom_call.1} parent=1 // pred_check
      _
    $region53: #{tpu_custom_call.1} parent=1 // pred_check_branch
      %273 = sbr.rel (0) target = $region55
    $region54: #{tpu_custom_call.1} parent=1 // pred_region
      %s275 = ssub.s32 256, 256
      %276 = vsyncadd [#allocation9], %s275
      %s277 = sshll.u32 [#allocation10], 4
      %s278 = int_to_ptr.vmem [resolvable:$true] %s277
      %283 = dma.vmem_to_hbm [thread:$0]  %s278, 256, %s8, [#allocation9], 128, 128, 8
    $region55: #{tpu_custom_call.1} parent=1 // pred_fallthru
      _
    // Predicated region
    $region56: #{tpu_custom_call.1} parent=1 // pred_check
      _
    $region57: #{tpu_custom_call.1} parent=1 // pred_check_branch
      %285 = sbr.rel (0) target = $region59
    $region58: #{tpu_custom_call.1} parent=1 // pred_region
      %286 = dma.done [#allocation9], 256
    $region59: #{tpu_custom_call.1} parent=1 // pred_fallthru
      _
    %287 = vsyncpa [#allocation8], 1
    %288 = vsyncpa [#allocation9], 1
  %289 = vsyncmov [#allocation4]
  %s290 = vpop.sfrf %289
  %p291 = scmp.eq.s32.totalorder %s290, 0
  %p292 = pneg %p291
  %294 = shalt.err (%p292)

</llo_original>
